<compile_context>
chip_gen: v5e
topology: v5e:2x2
jax: 0.10.0
libtpu: 0.0.40
codegen_flags: <defaults>
</compile_context>

<pallas_src>
import functools

import jax
import jax.numpy as jnp
from jax.experimental import pallas as pl
from jax.experimental.pallas import tpu as pltpu

SUBLANE = 8


def _mamdr_kernel(x_ref, w1_ref, b1_ref, w2_ref, b2_ref, o_ref):
    # Hidden layer + leaky_relu (negative_slope = 0.01).
    h = jnp.dot(x_ref[...], w1_ref[...],
                preferred_element_type=jnp.float32) + b1_ref[...].astype(jnp.float32)
    h = jnp.where(h > 0, h, 0.01 * h)
    # Output layer: narrow [tile_b, 2] result, stored directly.
    out = jnp.dot(h.astype(w2_ref.dtype), w2_ref[...],
                  preferred_element_type=jnp.float32) + b2_ref[...].astype(jnp.float32)
    o_ref[...] = out.astype(o_ref.dtype)


def _round_up(v, m):
    return ((v + m - 1) // m) * m


def merge_mamdr_params(shared_params, specific_params_stacked):
    """Merge shared + mean(specific) params.  Hoist this out of the per-call
    path when the weights are static across inference calls."""
    sw1, sb1, sw2, sb2 = shared_params
    pw1, pb1, pw2, pb2 = specific_params_stacked
    w1 = sw1 + jnp.mean(pw1, axis=0)                       # [D, H]
    b1 = (sb1 + jnp.mean(pb1, axis=0)).reshape(1, -1)      # [1, H]
    w2 = sw2 + jnp.mean(pw2, axis=0)                       # [H, N]
    b2 = (sb2 + jnp.mean(pb2, axis=0)).reshape(1, -1)      # [1, N]
    return w1, b1, w2, b2


def _pick_tile_b(B):
    """Batch tile: large tiles for big B (amortize per-step cost, bigger DMAs);
    mid-size B forced to >= 2 grid steps so v7x's second TC is not idle."""
    if B >= 4096:
        return 1024
    if B >= 1024:
        return 512
    if B >= 256:
        return 128
    if B >= 64:
        return _round_up(pl.cdiv(B, 2), SUBLANE)   # guarantee >= 2 grid steps
    return _round_up(B, SUBLANE) if B > SUBLANE else B


def mamdr_forward_merged(x, w1, b1, w2, b2):
    """x: [B, D].  Merged params.  Returns [B, 2] float32."""
    B, D = x.shape
    H = w1.shape[1]
    N = w2.shape[1]

    tile_b = _pick_tile_b(B)
    grid = (pl.cdiv(B, tile_b),)

    return pl.pallas_call(
        _mamdr_kernel,
        out_shape=jax.ShapeDtypeStruct((B, N), jnp.float32),
        grid=grid,
        in_specs=[
            pl.BlockSpec((tile_b, D), lambda i: (i, 0)),   # x tile streams
            pl.BlockSpec((D, H), lambda i: (0, 0)),        # weights VMEM-resident
            pl.BlockSpec((1, H), lambda i: (0, 0)),
            pl.BlockSpec((H, N), lambda i: (0, 0)),
            pl.BlockSpec((1, N), lambda i: (0, 0)),
        ],
        out_specs=pl.BlockSpec((tile_b, N), lambda i: (i, 0)),
        compiler_params=pltpu.CompilerParams(
            dimension_semantics=("parallel",)),
    )(x, w1, b1, w2, b2)


def mamdr_forward(x, shared_params, specific_params_stacked):
    """Convenience wrapper: merge params then run the kernel."""
    w1, b1, w2, b2 = merge_mamdr_params(shared_params, specific_params_stacked)
    return mamdr_forward_merged(x, w1, b1, w2, b2)


def _reference(x, shared_params, specific_params_stacked):
    sw1, sb1, sw2, sb2 = shared_params
    pw1, pb1, pw2, pb2 = specific_params_stacked
    w1 = sw1 + jnp.mean(pw1, axis=0)
    b1 = sb1 + jnp.mean(pb1, axis=0)
    w2 = sw2 + jnp.mean(pw2, axis=0)
    b2 = sb2 + jnp.mean(pb2, axis=0)
    h = x @ w1 + b1
    h = jnp.where(h > 0, h, 0.01 * h)
    return h @ w2 + b2


if __name__ == "__main__":
    # Config consistent with the module: user_dim + item_dim = input_dim.
    user_dim, item_dim = 16, 16
    input_dim = user_dim + item_dim          # 32
    hidden_dim = 32
    num_source_domain = 3                    # -> 2 specific MLPs
    n_spec = num_source_domain - 1
    batch = 8

    key = jax.random.PRNGKey(0)
    ks = jax.random.split(key, 10)

    x = jax.random.normal(ks[0], (batch, input_dim), dtype=jnp.float32)

    # Shared MLP params (torch.randn-style standard normal init, deterministic).
    sw1 = jax.random.normal(ks[1], (input_dim, hidden_dim), dtype=jnp.float32)
    sb1 = jax.random.normal(ks[2], (hidden_dim,), dtype=jnp.float32)
    sw2 = jax.random.normal(ks[3], (hidden_dim, 2), dtype=jnp.float32)
    sb2 = jax.random.normal(ks[4], (2,), dtype=jnp.float32)

    # Specific MLP params, stacked along a leading domain axis.
    pw1 = jax.random.normal(ks[5], (n_spec, input_dim, hidden_dim), dtype=jnp.float32)
    pb1 = jax.random.normal(ks[6], (n_spec, hidden_dim), dtype=jnp.float32)
    pw2 = jax.random.normal(ks[7], (n_spec, hidden_dim, 2), dtype=jnp.float32)
    pb2 = jax.random.normal(ks[8], (n_spec, 2), dtype=jnp.float32)

    shared = (sw1, sb1, sw2, sb2)
    specific = (pw1, pb1, pw2, pb2)

    out = mamdr_forward(x, shared, specific)
    out = jax.block_until_ready(out)

    ref = _reference(x, shared, specific)
    assert out.shape == (batch, 2)
    assert jnp.allclose(out, ref, atol=1e-4, rtol=1e-4), "mismatch vs. JAX reference"

    print("KERNEL_OK")
</pallas_src>

<mosaic_0001>
module attributes {stable_mosaic.version = 11 : i64} {
  func.func @_mamdr_kernel(%arg0: i32, %arg1: memref<8x32xf32, #tpu.memory_space<vmem>>, %arg2: memref<32x32xf32, #tpu.memory_space<vmem>>, %arg3: memref<1x32xf32, #tpu.memory_space<vmem>>, %arg4: memref<32x2xf32, #tpu.memory_space<vmem>>, %arg5: memref<1x2xf32, #tpu.memory_space<vmem>>, %arg6: memref<8x2xf32, #tpu.memory_space<vmem>>) attributes {dimension_semantics = [#tpu.dimension_semantics<parallel>], iteration_bounds = array<i64: 1>, scalar_prefetch = 0 : i64, scratch_operands = 0 : i64, tpu.core_type = #tpu.core_type<tc>, window_params = [{transform_indices = @transform_0, window_bounds = array<i64: 8, 32>}, {pipeline_mode = #tpu.pipeline_mode<synchronous>, transform_indices = @transform_1, window_bounds = array<i64: 32, 32>}, {pipeline_mode = #tpu.pipeline_mode<synchronous>, transform_indices = @transform_2, window_bounds = array<i64: 1, 32>}, {pipeline_mode = #tpu.pipeline_mode<synchronous>, transform_indices = @transform_3, window_bounds = array<i64: 32, 2>}, {pipeline_mode = #tpu.pipeline_mode<synchronous>, transform_indices = @transform_4, window_bounds = array<i64: 1, 2>}, {transform_indices = @transform_5, window_bounds = array<i64: 8, 2>}]} {
    %c0 = arith.constant 0 : index
    %c0_0 = arith.constant 0 : index
    %0 = vector.load %arg1[%c0, %c0_0] : memref<8x32xf32, #tpu.memory_space<vmem>>, vector<8x32xf32>
    %c0_1 = arith.constant 0 : index
    %c0_2 = arith.constant 0 : index
    %1 = vector.load %arg2[%c0_1, %c0_2] : memref<32x32xf32, #tpu.memory_space<vmem>>, vector<32x32xf32>
    %cst = arith.constant dense<0.000000e+00> : vector<8x32xf32>
    %2 = tpu.matmul %0, %1, %cst {dimension_numbers = #tpu.dot_dimension_numbers<[1], [0], [0], [1], [0, 0, 1, 1], [], []>} : vector<8x32xf32>, vector<32x32xf32>, vector<8x32xf32> -> vector<8x32xf32>
    %c0_3 = arith.constant 0 : index
    %c0_4 = arith.constant 0 : index
    %3 = vector.load %arg3[%c0_3, %c0_4] : memref<1x32xf32, #tpu.memory_space<vmem>>, vector<1x32xf32>
    %4 = vector.broadcast %3 : vector<1x32xf32> to vector<8x32xf32>
    %5 = arith.addf %2, %4 : vector<8x32xf32>
    %cst_5 = arith.constant 0.000000e+00 : f32
    %6 = vector.broadcast %cst_5 : f32 to vector<8x32xf32>
    %7 = arith.cmpf ogt, %5, %6 : vector<8x32xf32>
    %cst_6 = arith.constant 0.00999999977 : f32
    %8 = vector.broadcast %cst_6 : f32 to vector<8x32xf32>
    %9 = arith.mulf %8, %5 : vector<8x32xf32>
    %10 = arith.select %7, %5, %9 : vector<8x32xi1>, vector<8x32xf32>
    %c0_7 = arith.constant 0 : index
    %c0_8 = arith.constant 0 : index
    %11 = vector.load %arg4[%c0_7, %c0_8] : memref<32x2xf32, #tpu.memory_space<vmem>>, vector<32x2xf32>
    %cst_9 = arith.constant dense<0.000000e+00> : vector<8x2xf32>
    %12 = tpu.matmul %10, %11, %cst_9 {dimension_numbers = #tpu.dot_dimension_numbers<[1], [0], [0], [1], [0, 0, 1, 1], [], []>} : vector<8x32xf32>, vector<32x2xf32>, vector<8x2xf32> -> vector<8x2xf32>
    %c0_10 = arith.constant 0 : index
    %c0_11 = arith.constant 0 : index
    %13 = vector.load %arg5[%c0_10, %c0_11] : memref<1x2xf32, #tpu.memory_space<vmem>>, vector<1x2xf32>
    %14 = vector.broadcast %13 : vector<1x2xf32> to vector<8x2xf32>
    %15 = arith.addf %12, %14 : vector<8x2xf32>
    %c0_12 = arith.constant 0 : index
    %c0_13 = arith.constant 0 : index
    %16 = vector.load %arg6[%c0_12, %c0_13] : memref<8x2xf32, #tpu.memory_space<vmem>>, vector<8x2xf32>
    tpu.vector_store %arg6[%c0_12, %c0_13], %15 {strides = array<i32>} : memref<8x2xf32, #tpu.memory_space<vmem>>, vector<8x2xf32>,
    return
  }
  func.func @transform_0(%arg0: i32) -> (i32, i32) {
    %c0_i32 = arith.constant 0 : i32
    %c0_i32_0 = arith.constant 0 : i32
    return %arg0, %c0_i32 : i32, i32
  }
  func.func @transform_1(%arg0: i32) -> (i32, i32) {
    %c0_i32 = arith.constant 0 : i32
    %c0_i32_0 = arith.constant 0 : i32
    %c0_i32_1 = arith.constant 0 : i32
    return %c0_i32, %c0_i32_0 : i32, i32
  }
  func.func @transform_2(%arg0: i32) -> (i32, i32) {
    %c0_i32 = arith.constant 0 : i32
    %c0_i32_0 = arith.constant 0 : i32
    %c0_i32_1 = arith.constant 0 : i32
    return %c0_i32, %c0_i32_0 : i32, i32
  }
  func.func @transform_3(%arg0: i32) -> (i32, i32) {
    %c0_i32 = arith.constant 0 : i32
    %c0_i32_0 = arith.constant 0 : i32
    %c0_i32_1 = arith.constant 0 : i32
    return %c0_i32, %c0_i32_0 : i32, i32
  }
  func.func @transform_4(%arg0: i32) -> (i32, i32) {
    %c0_i32 = arith.constant 0 : i32
    %c0_i32_0 = arith.constant 0 : i32
    %c0_i32_1 = arith.constant 0 : i32
    return %c0_i32, %c0_i32_0 : i32, i32
  }
  func.func @transform_5(%arg0: i32) -> (i32, i32) {
    %c0_i32 = arith.constant 0 : i32
    %c0_i32_0 = arith.constant 0 : i32
    return %arg0, %c0_i32 : i32, i32
  }
}

</mosaic_0001>

<llo_original>
// kernel: tpu_custom_call.1
$region0: #{tpu_custom_call.1}
  #allocation0 [shape = 'u32[]', space=smem, size = 0x4, offset = 0x4, fixed_abs, tag = 'smem constant byte address 0x4 - core index']
  #allocation1 [shape = 'u32[72,128]{1,0:T(1,128)}', space=vmem, size = 0x9000, scoped, tag = 'internal scratch']
  %s0 = inlined_call_operand.hbm [shape: f32[8,32], index: 0, kind: input, shape index: {}]
  %s1 = inlined_call_operand.vmem [shape: f32[32,32], index: 1, kind: input, shape index: {}]
  %s2 = inlined_call_operand.vmem [shape: f32[1,32], index: 2, kind: input, shape index: {}]
  %s3 = inlined_call_operand.vmem [shape: f32[32,2], index: 3, kind: input, shape index: {}]
  %s4 = inlined_call_operand.vmem [shape: f32[1,2], index: 4, kind: input, shape index: {}]
  %s5 = inlined_call_operand.vmem [shape: f32[8,2], index: 5, kind: output, shape index: {}]
  %s6 = sld [smem:[#allocation0]]
  $region34: #{tpu_custom_call.1} parent=0
    _
  %s8 = ssub.s32 1, %s6
  %s9 = scalar_select 0, %s8, %s6
  $region1: #{tpu_custom_call.1} parent=0
    #allocation2 [shape = 'u8[4096]{0}', space=vmem, size = 0x1000, scoped, tag = 'input window, operand 0, single buffered']
    #allocation3 [shape = 's32[1]{0}', space=sflag, size = 0x4, scoped, tag = 'scoped memory for tpu_custom_call.1']
    %10 = vsyncpa [#allocation3], 0
    // Predicated region
    $region2: #{tpu_custom_call.1} parent=1 // pred_check
      _
    $region3: #{tpu_custom_call.1} parent=1 // pred_check_branch
      %12 = sbr.rel (0) target = $region5
    $region4: #{tpu_custom_call.1} parent=1 // pred_region
      %14 = vsyncadd [#allocation3], 0
      %s16 = sshll.u32 %s0, 4
      %s17 = int_to_ptr.hbm [resolvable:$true] %s16
      %s18 = sshll.u32 [#allocation2], 4
      %s19 = int_to_ptr.vmem [resolvable:$true] %s18
      %21 = dma.hbm_to_vmem [thread:$0]  %s17, 128, %s19, [#allocation3]
    $region5: #{tpu_custom_call.1} parent=1 // pred_fallthru
      _
    // Predicated region
    $region6: #{tpu_custom_call.1} parent=1 // pred_check
      _
    $region7: #{tpu_custom_call.1} parent=1 // pred_check_branch
      %23 = sbr.rel (0) target = $region9
    $region8: #{tpu_custom_call.1} parent=1 // pred_region
      _
    $region9: #{tpu_custom_call.1} parent=1 // pred_fallthru
      _
    // Predicated region
    $region10: #{tpu_custom_call.1} parent=1 // pred_check
      _
    $region11: #{tpu_custom_call.1} parent=1 // pred_check_branch
      %25 = sbr.rel (0) target = $region13
    $region12: #{tpu_custom_call.1} parent=1 // pred_region
      _
    $region13: #{tpu_custom_call.1} parent=1 // pred_fallthru
      _
    // Predicated region
    $region14: #{tpu_custom_call.1} parent=1 // pred_check
      _
    $region15: #{tpu_custom_call.1} parent=1 // pred_check_branch
      %27 = sbr.rel (0) target = $region17
    $region16: #{tpu_custom_call.1} parent=1 // pred_region
      _
    $region17: #{tpu_custom_call.1} parent=1 // pred_fallthru
      _
    // Predicated region
    $region18: #{tpu_custom_call.1} parent=1 // pred_check
      _
    $region19: #{tpu_custom_call.1} parent=1 // pred_check_branch
      %29 = sbr.rel (0) target = $region21
    $region20: #{tpu_custom_call.1} parent=1 // pred_region
      _
    $region21: #{tpu_custom_call.1} parent=1 // pred_fallthru
      _
    // Predicated region
    $region22: #{tpu_custom_call.1} parent=1 // pred_check
      _
    $region23: #{tpu_custom_call.1} parent=1 // pred_check_branch
      %31 = sbr.rel (0) target = $region25
    $region24: #{tpu_custom_call.1} parent=1 // pred_region
      %33 = dma.done [#allocation3], 128
    $region25: #{tpu_custom_call.1} parent=1 // pred_fallthru
      _
    %v34 = vld [vmem:[#allocation2] sm:$0xff]
    %v35 = vld [vmem:[%s1] sm:$0xff]
    %v36 = vld [vmem:[%s1 + $0x8] sm:$0xff]
    %v37 = vld [vmem:[%s1 + $0x10] sm:$0xff]
    %v38 = vld [vmem:[%s1 + $0x18] sm:$0xff]
    %v39 = vld [vmem:[%s2] sm:$0x1]
    %v41 = vperm.slane %v39, 0
    %vm43 = vcmask 261120
    %v45 = vsel %vm43, %v34, 0
    %47 = vmatpush.msra.mxu0 0.0
    %48 = vmatpush.msra.mxu0 0.0
    %49 = vmatpush.msra.mxu0 0.0
    %50 = vmatpush.msra.mxu0 0.0
    %51 = vmatpush.msra.mxu0 0.0
    %52 = vmatpush.msra.mxu0 0.0
    %53 = vmatpush.msra.mxu0 0.0
    %54 = vmatpush.msra.mxu0 0.0
    %55 = vmatpush.msra.mxu0 0.0
    %56 = vmatpush.msra.mxu0 0.0
    %57 = vmatpush.msra.mxu0 0.0
    %58 = vmatpush.msra.mxu0 0.0
    %59 = vmatpush.msra.mxu0 %v38
    %60 = vmatpush.msra.mxu0 %v37
    %61 = vmatpush.msra.mxu0 %v36
    %62 = vmatpush.msra.mxu0 %v35
    %63 = vmatmul.f32.gmra.mxu0 %v45
    %v64 = vpop.f32.mrf.mxu0
    %v65 = vadd.f32 %v41, %v64
    %66 = vdwg.mxu0
    %vm67 = vcmp.gt.f32.partialorder %v65, 0.0
    %v68 = vmul.f32 %v65, 0.01
    %v69 = vsel %vm67, %v65, %v68
    %v70 = vld [vmem:[%s3] sm:$0xff]
    %v71 = vld [vmem:[%s3 + $0x8] sm:$0xff]
    %v72 = vld [vmem:[%s3 + $0x10] sm:$0xff]
    %v73 = vld [vmem:[%s3 + $0x18] sm:$0xff]
    %v74 = vld [vmem:[%s4] sm:$0x1]
    %v76 = vperm.slane %v74, 0
    %v79 = vsel %vm43, %v69, 0
    %81 = vmatpush.msra.mxu0 0.0
    %82 = vmatpush.msra.mxu0 0.0
    %83 = vmatpush.msra.mxu0 0.0
    %84 = vmatpush.msra.mxu0 0.0
    %85 = vmatpush.msra.mxu0 0.0
    %86 = vmatpush.msra.mxu0 0.0
    %87 = vmatpush.msra.mxu0 0.0
    %88 = vmatpush.msra.mxu0 0.0
    %89 = vmatpush.msra.mxu0 0.0
    %90 = vmatpush.msra.mxu0 0.0
    %91 = vmatpush.msra.mxu0 0.0
    %92 = vmatpush.msra.mxu0 0.0
    %93 = vmatpush.msra.mxu0 %v73
    %94 = vmatpush.msra.mxu0 %v72
    %95 = vmatpush.msra.mxu0 %v71
    %96 = vmatpush.msra.mxu0 %v70
    %97 = vmatmul.f32.gmra.mxu0 %v79
    %v98 = vpop.f32.mrf.mxu0
    %v99 = vadd.f32 %v76, %v98
    %100 = vdwg.mxu0
    %vm101 = vcmask 15360
    %102 = vst.msk [vmem:[%s5] sm:$0xff] %vm101, %v99
    // Predicated region
    $region26: #{tpu_custom_call.1} parent=1 // pred_check
      _
    $region27: #{tpu_custom_call.1} parent=1 // pred_check_branch
      %104 = sbr.rel (0) target = $region29
    $region28: #{tpu_custom_call.1} parent=1 // pred_region
      _
    $region29: #{tpu_custom_call.1} parent=1 // pred_fallthru
      _
    // Predicated region
    $region30: #{tpu_custom_call.1} parent=1 // pred_check
      _
    $region31: #{tpu_custom_call.1} parent=1 // pred_check_branch
      %106 = sbr.rel (0) target = $region33
    $region32: #{tpu_custom_call.1} parent=1 // pred_region
      _
    $region33: #{tpu_custom_call.1} parent=1 // pred_fallthru
      _
    %107 = vsyncpa [#allocation3], 1

</llo_original>
